<compile_context>
chip_gen: v6e
topology: v6e:2x2x1
jax: 0.10.0
libtpu: 0.0.40
codegen_flags: <defaults>
</compile_context>

<pallas_src>
import functools

import jax
import jax.numpy as jnp
from jax.experimental import pallas as pl
from jax.experimental.pallas import tpu as pltpu

_LANE = 128


def _round_up(x, m):
    return ((x + m - 1) // m) * m


def _cdiv(a, b):
    return (a + b - 1) // b


def _num_tensorcores():
    """Best-effort TensorCore count of device 0 (2 on v7x, 1 on v5e/v6e)."""
    try:
        dev = jax.devices()[0]
        n = getattr(dev, "num_cores", None)
        if n:
            return int(n)
        kind = str(getattr(dev, "device_kind", "")).lower()
        if "v7" in kind or "tpu7" in kind:
            return 2
    except Exception:
        pass
    return 1


def _critic_kernel(h1p, h2d, x_ref, w1_ref, w2_ref, aux_ref, q_ref):
    """One batch tile of the critic MLP.

    aux rows: 0 -> b1 (padded to h1p), 1 -> b2, 2 -> w3 row, 3 -> [b3, 0, ...]
    """
    b1 = aux_ref[0:1, :h1p]          # (1, h1p) f32
    b2 = aux_ref[1:2, :h2d]          # (1, h2d) f32
    w3 = aux_ref[2:3, :h2d]          # (1, h2d) f32
    b3 = aux_ref[3:4, 0:1]           # (1, 1)   f32

    x = x_ref[...].astype(jnp.bfloat16)          # (tm, d_in)

    # fc1 + ReLU  (single MXU pass; concat already done in the wrapper)
    h1 = jnp.dot(x, w1_ref[...], preferred_element_type=jnp.float32)
    h1 = jnp.maximum(h1 + b1, 0.0)               # (tm, h1p)

    # fc2 + ReLU  (full 256-wide pass on all generations)
    h2 = jnp.dot(h1.astype(jnp.bfloat16), w2_ref[...],
                 preferred_element_type=jnp.float32)
    h2 = jnp.maximum(h2 + b2, 0.0)               # (tm, h2d)

    # q head: N=1 -> VPU multiply + lane reduce, no MXU pass.
    q = jnp.sum(h2 * w3, axis=-1, keepdims=True) + b3
    q_ref[...] = q.astype(q_ref.dtype)


def init_params(key, input_dim, n_actions, fc1_dims=150, fc2_dims=256):
    """Logical (unpadded, f32) params mirroring nn.Linear default init.
    Weights stored as (in_features, out_features)."""
    d_in = input_dim + n_actions
    k = jax.random.split(key, 6)

    def uinit(k_, shape, fan_in):
        bound = 1.0 / jnp.sqrt(jnp.float32(fan_in))
        return jax.random.uniform(k_, shape, jnp.float32, -bound, bound)

    w1 = uinit(k[0], (d_in, fc1_dims), d_in)
    b1 = uinit(k[1], (fc1_dims,), d_in)
    w2 = uinit(k[2], (fc1_dims, fc2_dims), fc1_dims)
    b2 = uinit(k[3], (fc2_dims,), fc1_dims)
    w3 = uinit(k[4], (fc2_dims, 1), fc2_dims)
    b3 = uinit(k[5], (1,), fc2_dims)
    return (w1, b1, w2, b2, w3, b3)


def prepare_params(params, input_dim, n_actions):
    """Pad fc1 to a lane multiple, cast weights to bf16, and pack the small
    vectors (b1, b2, w3, b3) into one aux array."""
    w1, b1, w2, b2, w3, b3 = params
    d_in, h1 = w1.shape
    assert d_in == input_dim + n_actions
    h2 = w2.shape[1]
    assert h2 % _LANE == 0, "fc2_dims must be a multiple of 128 for this kernel"
    h1p = _round_up(h1, _LANE)       # 150 -> 256

    w1p = jnp.zeros((d_in, h1p), jnp.float32).at[:, :h1].set(w1)
    w2p = jnp.zeros((h1p, h2), jnp.float32).at[:h1, :].set(w2)

    width = max(h1p, h2)
    aux = jnp.zeros((4, width), jnp.float32)
    aux = aux.at[0, :h1].set(b1.reshape(-1))
    aux = aux.at[1, :h2].set(b2.reshape(-1))
    aux = aux.at[2, :h2].set(w3.reshape(-1))
    aux = aux.at[3, 0].set(b3.reshape(())[()])

    return dict(
        w1=w1p.astype(jnp.bfloat16),
        w2=w2p.astype(jnp.bfloat16),
        aux=aux,
        h1p=h1p,
        h2=h2,
    )


def critic_forward(state, action, kparams, *, tile_m=1024, min_tiles=None):
    """state: (B, input_dim), action: (B, n_actions) -> q: (B, 1)"""
    w1, w2, aux = kparams["w1"], kparams["w2"], kparams["aux"]
    h1p, h2 = kparams["h1p"], kparams["h2"]

    # Fuse concat in the wrapper (one cheap XLA copy) -> single fc1 MXU pass.
    x = jnp.concatenate([state, action], axis=1).astype(jnp.float32)
    B, d_in = x.shape
    assert w1.shape[0] == d_in

    # Balanced batch tiling: bound padding waste to <8 rows per tile and keep
    # grid >= number of TensorCores (megacore on v7x) when the batch allows.
    num_tiles = max(1, _cdiv(B, tile_m))
    if min_tiles is None:
        min_tiles = _num_tensorcores()
    if min_tiles > 1 and B >= min_tiles * 8:
        num_tiles = max(num_tiles, min_tiles)
    tm = _round_up(_cdiv(B, num_tiles), 8)
    bp = tm * num_tiles
    if bp != B:
        x = jnp.pad(x, ((0, bp - B), (0, 0)))

    def resident(arr):
        # Constant block index -> weight stays VMEM-resident across the grid.
        return pl.BlockSpec(arr.shape, lambda i: (0, 0))

    kernel = functools.partial(_critic_kernel, h1p, h2)

    # TODO(synk): for the SAC twin critic, fuse Q1/Q2 into one pallas_call to
    # share the input tile DMA and grid-step overhead; only a single critic is
    # specified by this module.
    q = pl.pallas_call(
        kernel,
        out_shape=jax.ShapeDtypeStruct((bp, 1), jnp.float32),
        grid_spec=pltpu.PrefetchScalarGridSpec(
            num_scalar_prefetch=0,
            grid=(num_tiles,),
            in_specs=[
                pl.BlockSpec((tm, d_in), lambda i: (i, 0)),   # x tile
                resident(w1),
                resident(w2),
                resident(aux),
            ],
            out_specs=pl.BlockSpec((tm, 1), lambda i: (i, 0)),
        ),
        compiler_params=pltpu.CompilerParams(
            dimension_semantics=("parallel",),               # megacore on v7x
        ),
    )(x, w1, w2, aux)
    return q[:B]


def critic_ref(state, action, params):
    """Pure-JAX reference (same bf16-weight / f32-accumulate math, unpadded)."""
    w1, b1, w2, b2, w3, b3 = params
    x = jnp.concatenate([state, action], axis=1).astype(jnp.bfloat16)
    h1 = jnp.maximum(
        jnp.dot(x, w1.astype(jnp.bfloat16), preferred_element_type=jnp.float32) + b1,
        0.0)
    h2 = jnp.maximum(
        jnp.dot(h1.astype(jnp.bfloat16), w2.astype(jnp.bfloat16),
                preferred_element_type=jnp.float32) + b2,
        0.0)
    q = jnp.sum(h2 * w3.reshape(1, -1), axis=-1, keepdims=True) + b3
    return q


if __name__ == "__main__":
    key = jax.random.PRNGKey(0)
    k_param, k_state, k_action = jax.random.split(key, 3)

    batch = 2
    input_dim = 8      # input_dims = (8,)
    n_actions = 2

    logical_params = init_params(k_param, input_dim, n_actions)
    kernel_params = prepare_params(logical_params, input_dim, n_actions)

    state = jax.random.normal(k_state, (batch, input_dim), jnp.float32)
    action = jax.random.normal(k_action, (batch, n_actions), jnp.float32)

    q = critic_forward(state, action, kernel_params)
    q = jax.block_until_ready(q)

    q_ref = critic_ref(state, action, logical_params)
    assert q.shape == (batch, 1)
    assert jnp.allclose(q, q_ref, atol=1e-3, rtol=1e-3), (q, q_ref)

    print("KERNEL_OK")
</pallas_src>

<mosaic_0001>
module attributes {stable_mosaic.version = 11 : i64} {
  func.func @_critic_kernel(%arg0: i32, %arg1: memref<8x10xf32, #tpu.memory_space<vmem>>, %arg2: memref<10x256xbf16, #tpu.memory_space<vmem>>, %arg3: memref<256x256xbf16, #tpu.memory_space<vmem>>, %arg4: memref<4x256xf32, #tpu.memory_space<vmem>>, %arg5: memref<8x1xf32, #tpu.memory_space<vmem>>) attributes {dimension_semantics = [#tpu.dimension_semantics<parallel>], iteration_bounds = array<i64: 1>, scalar_prefetch = 0 : i64, scratch_operands = 0 : i64, tpu.core_type = #tpu.core_type<tc>, window_params = [{transform_indices = @transform_0, window_bounds = array<i64: 8, 10>}, {pipeline_mode = #tpu.pipeline_mode<synchronous>, transform_indices = @transform_1, window_bounds = array<i64: 10, 256>}, {pipeline_mode = #tpu.pipeline_mode<synchronous>, transform_indices = @transform_2, window_bounds = array<i64: 256, 256>}, {pipeline_mode = #tpu.pipeline_mode<synchronous>, transform_indices = @transform_3, window_bounds = array<i64: 4, 256>}, {transform_indices = @transform_4, window_bounds = array<i64: 8, 1>}]} {
    %c0 = arith.constant 0 : index
    %c0_0 = arith.constant 0 : index
    %0 = vector.load %arg4[%c0, %c0_0] : memref<4x256xf32, #tpu.memory_space<vmem>>, vector<1x256xf32>
    %c1 = arith.constant 1 : index
    %c0_1 = arith.constant 0 : index
    %1 = vector.load %arg4[%c1, %c0_1] : memref<4x256xf32, #tpu.memory_space<vmem>>, vector<1x256xf32>
    %c2 = arith.constant 2 : index
    %c0_2 = arith.constant 0 : index
    %2 = vector.load %arg4[%c2, %c0_2] : memref<4x256xf32, #tpu.memory_space<vmem>>, vector<1x256xf32>
    %c3 = arith.constant 3 : index
    %c0_3 = arith.constant 0 : index
    %3 = vector.load %arg4[%c3, %c0_3] : memref<4x256xf32, #tpu.memory_space<vmem>>, vector<1x1xf32>
    %c0_4 = arith.constant 0 : index
    %c0_5 = arith.constant 0 : index
    %4 = vector.load %arg1[%c0_4, %c0_5] : memref<8x10xf32, #tpu.memory_space<vmem>>, vector<8x10xf32>
    %5 = arith.truncf %4 : vector<8x10xf32> to vector<8x10xbf16>
    %c0_6 = arith.constant 0 : index
    %c0_7 = arith.constant 0 : index
    %6 = vector.load %arg2[%c0_6, %c0_7] : memref<10x256xbf16, #tpu.memory_space<vmem>>, vector<10x256xbf16>
    %cst = arith.constant dense<0.000000e+00> : vector<8x256xf32>
    %7 = tpu.matmul %5, %6, %cst {dimension_numbers = #tpu.dot_dimension_numbers<[1], [0], [0], [1], [0, 0, 1, 1], [], []>} : vector<8x10xbf16>, vector<10x256xbf16>, vector<8x256xf32> -> vector<8x256xf32>
    %8 = vector.broadcast %0 : vector<1x256xf32> to vector<8x256xf32>
    %9 = arith.addf %7, %8 : vector<8x256xf32>
    %cst_8 = arith.constant 0.000000e+00 : f32
    %10 = vector.broadcast %cst_8 : f32 to vector<8x256xf32>
    %11 = arith.maximumf %9, %10 : vector<8x256xf32>
    %12 = arith.truncf %11 : vector<8x256xf32> to vector<8x256xbf16>
    %c0_9 = arith.constant 0 : index
    %c0_10 = arith.constant 0 : index
    %13 = vector.load %arg3[%c0_9, %c0_10] : memref<256x256xbf16, #tpu.memory_space<vmem>>, vector<256x256xbf16>
    %cst_11 = arith.constant dense<0.000000e+00> : vector<8x256xf32>
    %14 = tpu.matmul %12, %13, %cst_11 {dimension_numbers = #tpu.dot_dimension_numbers<[1], [0], [0], [1], [0, 0, 1, 1], [], []>} : vector<8x256xbf16>, vector<256x256xbf16>, vector<8x256xf32> -> vector<8x256xf32>
    %15 = vector.broadcast %1 : vector<1x256xf32> to vector<8x256xf32>
    %16 = arith.addf %14, %15 : vector<8x256xf32>
    %cst_12 = arith.constant 0.000000e+00 : f32
    %17 = vector.broadcast %cst_12 : f32 to vector<8x256xf32>
    %18 = arith.maximumf %16, %17 : vector<8x256xf32>
    %19 = vector.broadcast %2 : vector<1x256xf32> to vector<8x256xf32>
    %20 = arith.mulf %18, %19 : vector<8x256xf32>
    %cst_13 = arith.constant dense<0.000000e+00> : vector<8xf32>
    %21 = vector.multi_reduction <add>, %20, %cst_13 [1] : vector<8x256xf32> to vector<8xf32>
    %22 = vector.shape_cast %21 : vector<8xf32> to vector<8x1xf32>
    %23 = vector.broadcast %3 : vector<1x1xf32> to vector<8x1xf32>
    %24 = arith.addf %22, %23 : vector<8x1xf32>
    %c0_14 = arith.constant 0 : index
    %c0_15 = arith.constant 0 : index
    %25 = vector.load %arg5[%c0_14, %c0_15] : memref<8x1xf32, #tpu.memory_space<vmem>>, vector<8x1xf32>
    tpu.vector_store %arg5[%c0_14, %c0_15], %24 {strides = array<i32>} : memref<8x1xf32, #tpu.memory_space<vmem>>, vector<8x1xf32>,
    return
  }
  func.func @transform_0(%arg0: i32) -> (i32, i32) {
    %c0_i32 = arith.constant 0 : i32
    %c0_i32_0 = arith.constant 0 : i32
    return %arg0, %c0_i32 : i32, i32
  }
  func.func @transform_1(%arg0: i32) -> (i32, i32) {
    %c0_i32 = arith.constant 0 : i32
    %c0_i32_0 = arith.constant 0 : i32
    %c0_i32_1 = arith.constant 0 : i32
    return %c0_i32, %c0_i32_0 : i32, i32
  }
  func.func @transform_2(%arg0: i32) -> (i32, i32) {
    %c0_i32 = arith.constant 0 : i32
    %c0_i32_0 = arith.constant 0 : i32
    %c0_i32_1 = arith.constant 0 : i32
    return %c0_i32, %c0_i32_0 : i32, i32
  }
  func.func @transform_3(%arg0: i32) -> (i32, i32) {
    %c0_i32 = arith.constant 0 : i32
    %c0_i32_0 = arith.constant 0 : i32
    %c0_i32_1 = arith.constant 0 : i32
    return %c0_i32, %c0_i32_0 : i32, i32
  }
  func.func @transform_4(%arg0: i32) -> (i32, i32) {
    %c0_i32 = arith.constant 0 : i32
    %c0_i32_0 = arith.constant 0 : i32
    return %arg0, %c0_i32 : i32, i32
  }
}

</mosaic_0001>

<llo_original>
// kernel: tpu_custom_call.1
$region0: #{tpu_custom_call.1}
  #allocation0 [shape = 'u32[]', space=smem, size = 0x4, offset = 0x4, fixed_abs, tag = 'smem constant byte address 0x4 - core index']
  #allocation1 [shape = 'u32[144,128]{1,0:T(1,128)}', space=vmem, size = 0x12000, scoped, tag = 'internal scratch']
  %s0 = inlined_call_operand.hbm [shape: f32[8,10], index: 0, kind: input, shape index: {}]
  %s1 = inlined_call_operand.hbm [shape: bf16[10,256], index: 1, kind: input, shape index: {}]
  %s2 = inlined_call_operand.hbm [shape: bf16[256,256], index: 2, kind: input, shape index: {}]
  %s3 = inlined_call_operand.hbm [shape: f32[4,256], index: 3, kind: input, shape index: {}]
  %s4 = inlined_call_operand.vmem [shape: f32[8,1], index: 4, kind: output, shape index: {}]
  %s5 = sld [smem:[#allocation0]]
  $region42: #{tpu_custom_call.1} parent=0
    _
  %s7 = ssub.s32 1, %s5
  %s8 = scalar_select 0, %s7, %s5
  $region1: #{tpu_custom_call.1} parent=0
    #allocation2 [shape = 'u8[4096]{0}', space=vmem, size = 0x1000, scoped, tag = 'input window, operand 0, single buffered']
    #allocation3 [shape = 's32[1]{0}', space=sflag, size = 0x4, scoped, tag = 'scoped memory for tpu_custom_call.1']
    #allocation4 [shape = 'u8[8192]{0}', space=vmem, size = 0x2000, scoped, tag = 'input window, operand 1, single buffered']
    #allocation5 [shape = 's32[1]{0}', space=sflag, size = 0x4, scoped, tag = 'scoped memory for tpu_custom_call.1']
    #allocation6 [shape = 'u8[131072]{0}', space=vmem, size = 0x20000, scoped, tag = 'input window, operand 2, single buffered']
    #allocation7 [shape = 'u8[4096]{0}', space=vmem, size = 0x1000, scoped, tag = 'input window, operand 3, single buffered']
    #allocation8 [shape = 's32[1]{0}', space=sflag, size = 0x4, scoped, tag = 'scoped memory for tpu_custom_call.1']
    %9 = vsyncpa [#allocation3], 0
    %10 = vsyncpa [#allocation5], 0
    %11 = vsyncpa [#allocation8], 0
    // Predicated region
    $region2: #{tpu_custom_call.1} parent=1 // pred_check
      _
    $region3: #{tpu_custom_call.1} parent=1 // pred_check_branch
      %13 = sbr.rel (0) target = $region5
    $region4: #{tpu_custom_call.1} parent=1 // pred_region
      %s15 = ssub.s32 128, 128
      %16 = vsyncadd [#allocation3], %s15
      %s18 = sshll.u32 [#allocation2], 4
      %s19 = int_to_ptr.vmem [resolvable:$true] %s18
      %21 = dma.hbm_to_vmem [thread:$0]  %s0, 128, %s19, [#allocation3]
    $region5: #{tpu_custom_call.1} parent=1 // pred_fallthru
      _
    // Predicated region
    $region6: #{tpu_custom_call.1} parent=1 // pred_check
      _
    $region7: #{tpu_custom_call.1} parent=1 // pred_check_branch
      %23 = sbr.rel (0) target = $region9
    $region8: #{tpu_custom_call.1} parent=1 // pred_region
      %s25 = ssub.s32 256, 256
      %26 = vsyncadd [#allocation5], %s25
      %s27 = sshll.u32 [#allocation4], 4
      %s28 = int_to_ptr.vmem [resolvable:$true] %s27
      %33 = dma.hbm_to_vmem [thread:$0]  %s1, 256, %s28, [#allocation5], 128, 128, 8
    $region9: #{tpu_custom_call.1} parent=1 // pred_fallthru
      _
    // Predicated region
    $region10: #{tpu_custom_call.1} parent=1 // pred_check
      _
    $region11: #{tpu_custom_call.1} parent=1 // pred_check_branch
      %35 = sbr.rel (0) target = $region13
    $region12: #{tpu_custom_call.1} parent=1 // pred_region
      %s37 = ssub.s32 4096, 4096
      %38 = vsyncadd [#allocation5], %s37
      %s39 = sshll.u32 [#allocation6], 4
      %s40 = int_to_ptr.vmem [resolvable:$true] %s39
      %45 = dma.hbm_to_vmem [thread:$0]  %s2, 4096, %s40, [#allocation5], 128, 128, 8
    $region13: #{tpu_custom_call.1} parent=1 // pred_fallthru
      _
    // Predicated region
    $region14: #{tpu_custom_call.1} parent=1 // pred_check
      _
    $region15: #{tpu_custom_call.1} parent=1 // pred_check_branch
      %47 = sbr.rel (0) target = $region17
    $region16: #{tpu_custom_call.1} parent=1 // pred_region
      %s49 = ssub.s32 128, 128
      %50 = vsyncadd [#allocation8], %s49
      %s52 = sshll.u32 [#allocation7], 4
      %s53 = int_to_ptr.vmem [resolvable:$true] %s52
      %55 = dma.hbm_to_vmem [thread:$0]  %s3, 128, %s53, [#allocation8]
    $region17: #{tpu_custom_call.1} parent=1 // pred_fallthru
      _
    // Predicated region
    $region18: #{tpu_custom_call.1} parent=1 // pred_check
      _
    $region19: #{tpu_custom_call.1} parent=1 // pred_check_branch
      %57 = sbr.rel (0) target = $region21
    $region20: #{tpu_custom_call.1} parent=1 // pred_region
      %58 = dma.done [#allocation3], 128
    $region21: #{tpu_custom_call.1} parent=1 // pred_fallthru
      _
    // Predicated region
    $region22: #{tpu_custom_call.1} parent=1 // pred_check
      _
    $region23: #{tpu_custom_call.1} parent=1 // pred_check_branch
      %60 = sbr.rel (0) target = $region25
    $region24: #{tpu_custom_call.1} parent=1 // pred_region
      %61 = dma.done [#allocation5], 256
    $region25: #{tpu_custom_call.1} parent=1 // pred_fallthru
      _
    // Predicated region
    $region26: #{tpu_custom_call.1} parent=1 // pred_check
      _
    $region27: #{tpu_custom_call.1} parent=1 // pred_check_branch
      %63 = sbr.rel (0) target = $region29
    $region28: #{tpu_custom_call.1} parent=1 // pred_region
      %64 = dma.done [#allocation5], 4096
    $region29: #{tpu_custom_call.1} parent=1 // pred_fallthru
      _
    // Predicated region
    $region30: #{tpu_custom_call.1} parent=1 // pred_check
      _
    $region31: #{tpu_custom_call.1} parent=1 // pred_check_branch
      %66 = sbr.rel (0) target = $region33
    $region32: #{tpu_custom_call.1} parent=1 // pred_region
      %67 = dma.done [#allocation8], 128
    $region33: #{tpu_custom_call.1} parent=1 // pred_fallthru
      _
    %v69 = vld [vmem:[#allocation7] ss:$4 sm:$0x3]
    %s70 = scalar_lea.vmem [#allocation7], 1
    %v71 = vld [vmem:[%s70] ss:$4 sm:$0x3]
    %s72 = scalar_lea.vmem [#allocation7], 2
    %v73 = vld [vmem:[%s72] ss:$4 sm:$0x3]
    %v74 = vld [vmem:[#allocation7 + $0x3] sm:$0x1]
    %v75 = vld [vmem:[#allocation2] sm:$0xff]
    %v76 = vpack.c.bf16 %v75, %v75
    %v77 = vld [vmem:[#allocation4] sm:$0xff]
    %v78 = vld [vmem:[#allocation4 + $0x8] sm:$0x11]
    %v80 = vlaneseq
    %v81 = vshrl.u32 %v80, 7
    %v82 = vsub.s32 0, %v81
    %v83 = vrot.slane %v69, %v82
    %v84 = vlaneseq
    %v85 = vshrl.u32 %v84, 7
    %v86 = vsub.s32 1, %v85
    %v87 = vrot.slane %v69, %v86
    %v92 = vunpack.c.l.b16 %v77
    %v93 = vunpack.c.h.b16 %v77
    %v94 = vunpack.c.l.b16 %v78
    %v95 = vunpack.c.h.b16 %v78
    %v96 = vpack.c.b16 %v94, %v92
    %v97 = vpack.c.b16 %v95, %v93
    %vm98 = vcmask 80896
    %v100 = vsel %vm98, %v76, 0
    %vm102 = vcmask 1044480
    %v104 = vsel %vm102, %v96, 0
    %v107 = vsel %vm102, %v97, 0
    %109 = vmatprep.subr.bf16.mxu0 0
    %110 = vmatpush1.bf16.msra.mxu0 0
    %111 = vmatprep.subr.bf16.mxu0 0
    %112 = vmatpush1.bf16.msra.mxu0 0
    %113 = vmatprep.subr.bf16.mxu0 0
    %114 = vmatpush1.bf16.msra.mxu0 0
    %115 = vmatprep.subr.bf16.mxu0 0
    %116 = vmatpush1.bf16.msra.mxu0 0
    %117 = vmatprep.subr.bf16.mxu0 0
    %118 = vmatpush1.bf16.msra.mxu0 0
    %119 = vmatprep.subr.bf16.mxu0 0
    %120 = vmatpush1.bf16.msra.mxu0 0
    %121 = vmatprep.subr.bf16.mxu0 0
    %122 = vmatpush1.bf16.msra.mxu0 0
    %123 = vmatprep.subr.bf16.mxu0 %v107
    %124 = vmatpush1.bf16.msra.mxu0 %v104
    %125 = vmatprep.subr.bf16.mxu0 0
    %126 = vmatpush2.bf16.msra.mxu0 0
    %127 = vmatprep.subr.bf16.mxu0 0
    %128 = vmatpush2.bf16.msra.mxu0 0
    %129 = vmatprep.subr.bf16.mxu0 0
    %130 = vmatpush2.bf16.msra.mxu0 0
    %131 = vmatprep.subr.bf16.mxu0 0
    %132 = vmatpush2.bf16.msra.mxu0 0
    %133 = vmatprep.subr.bf16.mxu0 0
    %134 = vmatpush2.bf16.msra.mxu0 0
    %135 = vmatprep.subr.bf16.mxu0 0
    %136 = vmatpush2.bf16.msra.mxu0 0
    %137 = vmatprep.subr.bf16.mxu0 0
    %138 = vmatpush2.bf16.msra.mxu0 0
    %139 = vmatprep.subr.bf16.mxu0 0
    %140 = vmatpush2.bf16.msra.mxu0 0
    %141 = vmatprep.mubr.bf16.mxu0 0
    %142 = vmatmul.mubr.bf16.gmra.mxu0 %v100
    %v143 = vpop.f32.mrf.mxu0
    %v144 = vadd.f32 %v83, %v143
    %v145 = vpop.f32.mrf.mxu0
    %v146 = vadd.f32 %v87, %v145
    %v147 = vpop.f32.mrf.mxu0
    %v148 = vpop.f32.mrf.mxu0
    %149 = vdwg.mxu0
    %v150 = vmax.f32 %v144, 0.0
    %v151 = vmax.f32 %v146, 0.0
    %v152 = vpack.c.bf16 %v150, %v150
    %v153 = vpack.c.bf16 %v151, %v151
    %v154 = vld [vmem:[#allocation6] sm:$0xff]
    %v155 = vld [vmem:[#allocation6 + $0x8] sm:$0xff]
    %v156 = vld [vmem:[#allocation6 + $0x10] sm:$0xff]
    %v157 = vld [vmem:[#allocation6 + $0x18] sm:$0xff]
    %v158 = vld [vmem:[#allocation6 + $0x20] sm:$0xff]
    %v159 = vld [vmem:[#allocation6 + $0x28] sm:$0xff]
    %v160 = vld [vmem:[#allocation6 + $0x30] sm:$0xff]
    %v161 = vld [vmem:[#allocation6 + $0x38] sm:$0xff]
    %v162 = vld [vmem:[#allocation6 + $0x40] sm:$0xff]
    %v163 = vld [vmem:[#allocation6 + $0x48] sm:$0xff]
    %v164 = vld [vmem:[#allocation6 + $0x50] sm:$0xff]
    %v165 = vld [vmem:[#allocation6 + $0x58] sm:$0xff]
    %v166 = vld [vmem:[#allocation6 + $0x60] sm:$0xff]
    %v167 = vld [vmem:[#allocation6 + $0x68] sm:$0xff]
    %v168 = vld [vmem:[#allocation6 + $0x70] sm:$0xff]
    %v169 = vld [vmem:[#allocation6 + $0x78] sm:$0xff]
    %v170 = vld [vmem:[#allocation6 + $0x80] sm:$0xff]
    %v171 = vld [vmem:[#allocation6 + $0x88] sm:$0xff]
    %v172 = vld [vmem:[#allocation6 + $0x90] sm:$0xff]
    %v173 = vld [vmem:[#allocation6 + $0x98] sm:$0xff]
    %v174 = vld [vmem:[#allocation6 + $0xa0] sm:$0xff]
    %v175 = vld [vmem:[#allocation6 + $0xa8] sm:$0xff]
    %v176 = vld [vmem:[#allocation6 + $0xb0] sm:$0xff]
    %v177 = vld [vmem:[#allocation6 + $0xb8] sm:$0xff]
    %v178 = vld [vmem:[#allocation6 + $0xc0] sm:$0xff]
    %v179 = vld [vmem:[#allocation6 + $0xc8] sm:$0xff]
    %v180 = vld [vmem:[#allocation6 + $0xd0] sm:$0xff]
    %v181 = vld [vmem:[#allocation6 + $0xd8] sm:$0xff]
    %v182 = vld [vmem:[#allocation6 + $0xe0] sm:$0xff]
    %v183 = vld [vmem:[#allocation6 + $0xe8] sm:$0xff]
    %v184 = vld [vmem:[#allocation6 + $0xf0] sm:$0xff]
    %v185 = vld [vmem:[#allocation6 + $0xf8] sm:$0xff]
    %v187 = vlaneseq
    %v188 = vshrl.u32 %v187, 7
    %v189 = vsub.s32 0, %v188
    %v190 = vrot.slane %v71, %v189
    %v191 = vlaneseq
    %v192 = vshrl.u32 %v191, 7
    %v193 = vsub.s32 1, %v192
    %v194 = vrot.slane %v71, %v193
    %v229 = vunpack.c.l.b16 %v154
    %v230 = vunpack.c.h.b16 %v154
    %v231 = vunpack.c.l.b16 %v155
    %v232 = vunpack.c.h.b16 %v155
    %v233 = vunpack.c.l.b16 %v156
    %v234 = vunpack.c.h.b16 %v156
    %v235 = vunpack.c.l.b16 %v157
    %v236 = vunpack.c.h.b16 %v157
    %v237 = vunpack.c.l.b16 %v158
    %v238 = vunpack.c.h.b16 %v158
    %v239 = vunpack.c.l.b16 %v159
    %v240 = vunpack.c.h.b16 %v159
    %v241 = vunpack.c.l.b16 %v160
    %v242 = vunpack.c.h.b16 %v160
    %v243 = vunpack.c.l.b16 %v161
    %v244 = vunpack.c.h.b16 %v161
    %v245 = vunpack.c.l.b16 %v162
    %v246 = vunpack.c.h.b16 %v162
    %v247 = vunpack.c.l.b16 %v163
    %v248 = vunpack.c.h.b16 %v163
    %v249 = vunpack.c.l.b16 %v164
    %v250 = vunpack.c.h.b16 %v164
    %v251 = vunpack.c.l.b16 %v165
    %v252 = vunpack.c.h.b16 %v165
    %v253 = vunpack.c.l.b16 %v166
    %v254 = vunpack.c.h.b16 %v166
    %v255 = vunpack.c.l.b16 %v167
    %v256 = vunpack.c.h.b16 %v167
    %v257 = vunpack.c.l.b16 %v168
    %v258 = vunpack.c.h.b16 %v168
    %v259 = vunpack.c.l.b16 %v169
    %v260 = vunpack.c.h.b16 %v169
    %v261 = vunpack.c.l.b16 %v170
    %v262 = vunpack.c.h.b16 %v170
    %v263 = vunpack.c.l.b16 %v171
    %v264 = vunpack.c.h.b16 %v171
    %v265 = vunpack.c.l.b16 %v172
    %v266 = vunpack.c.h.b16 %v172
    %v267 = vunpack.c.l.b16 %v173
    %v268 = vunpack.c.h.b16 %v173
    %v269 = vunpack.c.l.b16 %v174
    %v270 = vunpack.c.h.b16 %v174
    %v271 = vunpack.c.l.b16 %v175
    %v272 = vunpack.c.h.b16 %v175
    %v273 = vunpack.c.l.b16 %v176
    %v274 = vunpack.c.h.b16 %v176
    %v275 = vunpack.c.l.b16 %v177
    %v276 = vunpack.c.h.b16 %v177
    %v277 = vunpack.c.l.b16 %v178
    %v278 = vunpack.c.h.b16 %v178
    %v279 = vunpack.c.l.b16 %v179
    %v280 = vunpack.c.h.b16 %v179
    %v281 = vunpack.c.l.b16 %v180
    %v282 = vunpack.c.h.b16 %v180
    %v283 = vunpack.c.l.b16 %v181
    %v284 = vunpack.c.h.b16 %v181
    %v285 = vunpack.c.l.b16 %v182
    %v286 = vunpack.c.h.b16 %v182
    %v287 = vunpack.c.l.b16 %v183
    %v288 = vunpack.c.h.b16 %v183
    %v289 = vunpack.c.l.b16 %v184
    %v290 = vunpack.c.h.b16 %v184
    %v291 = vunpack.c.l.b16 %v185
    %v292 = vunpack.c.h.b16 %v185
    %v293 = vpack.c.b16 %v231, %v229
    %v294 = vpack.c.b16 %v232, %v230
    %v295 = vpack.c.b16 %v235, %v233
    %v296 = vpack.c.b16 %v236, %v234
    %v297 = vpack.c.b16 %v239, %v237
    %v298 = vpack.c.b16 %v240, %v238
    %v299 = vpack.c.b16 %v243, %v241
    %v300 = vpack.c.b16 %v244, %v242
    %v301 = vpack.c.b16 %v247, %v245
    %v302 = vpack.c.b16 %v248, %v246
    %v303 = vpack.c.b16 %v251, %v249
    %v304 = vpack.c.b16 %v252, %v250
    %v305 = vpack.c.b16 %v255, %v253
    %v306 = vpack.c.b16 %v256, %v254
    %v307 = vpack.c.b16 %v259, %v257
    %v308 = vpack.c.b16 %v260, %v258
    %v309 = vpack.c.b16 %v263, %v261
    %v310 = vpack.c.b16 %v264, %v262
    %v311 = vpack.c.b16 %v267, %v265
    %v312 = vpack.c.b16 %v268, %v266
    %v313 = vpack.c.b16 %v271, %v269
    %v314 = vpack.c.b16 %v272, %v270
    %v315 = vpack.c.b16 %v275, %v273
    %v316 = vpack.c.b16 %v276, %v274
    %v317 = vpack.c.b16 %v279, %v277
    %v318 = vpack.c.b16 %v280, %v278
    %v319 = vpack.c.b16 %v283, %v281
    %v320 = vpack.c.b16 %v284, %v282
    %v321 = vpack.c.b16 %v287, %v285
    %v322 = vpack.c.b16 %v288, %v286
    %v323 = vpack.c.b16 %v291, %v289
    %v324 = vpack.c.b16 %v292, %v290
    %357 = vmatprep.subr.bf16.mxu0 %v308
    %358 = vmatpush1.bf16.msra.mxu0 %v307
    %359 = vmatprep.subr.bf16.mxu0 %v306
    %360 = vmatpush1.bf16.msra.mxu0 %v305
    %361 = vmatprep.subr.bf16.mxu0 %v304
    %362 = vmatpush1.bf16.msra.mxu0 %v303
    %363 = vmatprep.subr.bf16.mxu0 %v302
    %364 = vmatpush1.bf16.msra.mxu0 %v301
    %365 = vmatprep.subr.bf16.mxu0 %v300
    %366 = vmatpush1.bf16.msra.mxu0 %v299
    %367 = vmatprep.subr.bf16.mxu0 %v298
    %368 = vmatpush1.bf16.msra.mxu0 %v297
    %369 = vmatprep.subr.bf16.mxu0 %v296
    %370 = vmatpush1.bf16.msra.mxu0 %v295
    %371 = vmatprep.subr.bf16.mxu0 %v294
    %372 = vmatpush1.bf16.msra.mxu0 %v293
    %373 = vmatprep.subr.bf16.mxu0 %v324
    %374 = vmatpush2.bf16.msra.mxu0 %v323
    %375 = vmatprep.subr.bf16.mxu0 %v322
    %376 = vmatpush2.bf16.msra.mxu0 %v321
    %377 = vmatprep.subr.bf16.mxu0 %v320
    %378 = vmatpush2.bf16.msra.mxu0 %v319
    %379 = vmatprep.subr.bf16.mxu0 %v318
    %380 = vmatpush2.bf16.msra.mxu0 %v317
    %381 = vmatprep.subr.bf16.mxu0 %v316
    %382 = vmatpush2.bf16.msra.mxu0 %v315
    %383 = vmatprep.subr.bf16.mxu0 %v314
    %384 = vmatpush2.bf16.msra.mxu0 %v313
    %385 = vmatprep.subr.bf16.mxu0 %v312
    %386 = vmatpush2.bf16.msra.mxu0 %v311
    %387 = vmatprep.subr.bf16.mxu0 %v310
    %388 = vmatpush2.bf16.msra.mxu0 %v309
    %389 = vmatprep.mubr.bf16.mxu0 %v153
    %390 = vmatmul.mubr.bf16.gmra.mxu0 %v152
    %v391 = vpop.f32.mrf.mxu0
    %v392 = vadd.f32 %v190, %v391
    %v393 = vpop.f32.mrf.mxu0
    %v394 = vadd.f32 %v194, %v393
    %v395 = vpop.f32.mrf.mxu0
    %v396 = vpop.f32.mrf.mxu0
    %397 = vdwg.mxu0
    %v398 = vmax.f32 %v392, 0.0
    %v399 = vmax.f32 %v394, 0.0
    %v401 = vlaneseq
    %v402 = vshrl.u32 %v401, 7
    %v403 = vsub.s32 0, %v402
    %v404 = vrot.slane %v73, %v403
    %v405 = vlaneseq
    %v406 = vshrl.u32 %v405, 7
    %v407 = vsub.s32 1, %v406
    %v408 = vrot.slane %v73, %v407
    %v411 = vmul.f32 %v398, %v404
    %v412 = vmul.f32 %v399, %v408
    %v413 = vadd.f32 %v411, %v412
    %414 = vadd.xlane.f32.xlu0 %v413
    %v415 = vpop.xlane.xlu0 %414
    %v416 = vlaneseq
    %v417 = vshrl.u32 %v416, 7
    %v418 = vsub.s32 0, %v417
    %v419 = vrot.slane %v74, %v418
    %v420 = vadd.f32 %v415, %v419
    %vm421 = vcmask 7168
    %422 = vst.msk [vmem:[%s4] sm:$0xff] %vm421, %v420
    // Predicated region
    $region34: #{tpu_custom_call.1} parent=1 // pred_check
      _
    $region35: #{tpu_custom_call.1} parent=1 // pred_check_branch
      %424 = sbr.rel (0) target = $region37
    $region36: #{tpu_custom_call.1} parent=1 // pred_region
      _
    $region37: #{tpu_custom_call.1} parent=1 // pred_fallthru
      _
    // Predicated region
    $region38: #{tpu_custom_call.1} parent=1 // pred_check
      _
    $region39: #{tpu_custom_call.1} parent=1 // pred_check_branch
      %426 = sbr.rel (0) target = $region41
    $region40: #{tpu_custom_call.1} parent=1 // pred_region
      _
    $region41: #{tpu_custom_call.1} parent=1 // pred_fallthru
      _
    %427 = vsyncpa [#allocation3], 1
    %428 = vsyncpa [#allocation5], 1
    %429 = vsyncpa [#allocation8], 1

</llo_original>
